<compile_context>
chip_gen: v5e
topology: v5e:2x2
jax: 0.10.0
libtpu: 0.0.40
codegen_flags: <defaults>
</compile_context>

<pallas_src>
import jax
import jax.numpy as jnp
from jax.experimental import pallas as pl
from jax.experimental.pallas import tpu as pltpu


def _ca_kernel(x_ref, w1_ref, wh_ref, ww_ref, ph_ref, pw_ref, eh_ref, ew_ref,
               out_ref):
    """One grid step: a (Bb, C, H*W) lane-dense block of the batch."""
    w1 = w1_ref[...].astype(jnp.float32)      # (Cr, C)
    wh = wh_ref[...].astype(jnp.float32)      # (C, Cr)
    ww = ww_ref[...].astype(jnp.float32)      # (C, Cr)
    p_h = ph_ref[...]                         # (L, H)  mean over W
    p_w = pw_ref[...]                         # (L, W)  mean over H
    e_h = eh_ref[...]                         # (H, L)  one-hot broadcast
    e_w = ew_ref[...]                         # (W, L)  one-hot broadcast

    bb = x_ref.shape[0]
    for b in range(bb):                       # small static unroll (bb <= 8)
        x = x_ref[b].astype(jnp.float32)      # (C, L) lane-dense

        # Directional average pools as MXU matmuls (stay lane-dense).
        x_h = jnp.dot(x, p_h, preferred_element_type=jnp.float32)    # (C, H)
        x_w = jnp.dot(x, p_w, preferred_element_type=jnp.float32)    # (C, W)

        # Shared 1x1 conv (C -> Cr) + ReLU; two dots, no concat/slice.
        y_h = jnp.maximum(
            jnp.dot(w1, x_h, preferred_element_type=jnp.float32), 0.0)
        y_w = jnp.maximum(
            jnp.dot(w1, x_w, preferred_element_type=jnp.float32), 0.0)

        # F_h / F_w (Cr -> C) + sigmoid (tiny tiles -> cheap EUP work).
        s_h = jax.nn.sigmoid(
            jnp.dot(wh, y_h, preferred_element_type=jnp.float32))    # (C, H)
        s_w = jax.nn.sigmoid(
            jnp.dot(ww, y_w, preferred_element_type=jnp.float32))    # (C, W)

        # Broadcast gates back to (C, L) with one-hot matmuls; avoids any
        # in-kernel (C, H, W) relayout.
        g_h = jnp.dot(s_h, e_h, preferred_element_type=jnp.float32)  # (C, L)
        g_w = jnp.dot(s_w, e_w, preferred_element_type=jnp.float32)  # (C, L)

        # out = x * s_h * s_w + x  ==  x * (g_h * g_w + 1)
        out_ref[b] = (x * (g_h * g_w + 1.0)).astype(out_ref.dtype)


def _pick_block_b(B, C, L, itemsize):
    """Batch elements per grid step: fit VMEM, keep >=2 steps, bound unroll."""
    per_elem = 4 * C * L * itemsize          # in + out tile, double-buffered
    vmem_budget = 40 * 1024 * 1024           # v7x-safe (64 MiB physical VMEM)
    cap = max(1, vmem_budget // per_elem)
    cap = min(cap, 8)                        # bound the static unroll
    if B >= 2:
        cap = min(cap, max(1, B // 2))       # >=2 grid steps for v7x's 2 TCs
    bb = 1
    for d in range(1, B + 1):
        if B % d == 0 and d <= cap:
            bb = d
    return bb


def ca_module_forward(x, w1, wh, ww):
    """Coordinate-attention forward.

    x: (B, C, H, W); w1: (Cr, C); wh, ww: (C, Cr). Returns (B, C, H, W).
    """
    B, C, H, W = x.shape
    Cr = w1.shape[0]
    L = H * W

    # Lane-dense view of the activation (free, contiguous reshape).
    x2 = x.reshape(B, C, L)

    # Constant pooling / broadcast matrices (tiny; DMA'd once and kept).
    l_idx = jnp.arange(L, dtype=jnp.int32)
    row = l_idx // W                         # h index of flat position
    col = l_idx % W                          # w index of flat position
    p_h = (row[:, None] == jnp.arange(H)[None, :]).astype(jnp.float32) / W   # (L, H)
    p_w = (col[:, None] == jnp.arange(W)[None, :]).astype(jnp.float32) / H   # (L, W)
    e_h = (jnp.arange(H)[:, None] == row[None, :]).astype(jnp.float32)       # (H, L)
    e_w = (jnp.arange(W)[:, None] == col[None, :]).astype(jnp.float32)       # (W, L)

    bb = _pick_block_b(B, C, L, x.dtype.itemsize)
    grid = (B // bb,)

    tile_bytes = bb * C * L * x.dtype.itemsize
    vmem_limit = int(min(48 * 1024 * 1024,
                         max(32 * 1024 * 1024,
                             8 * tile_bytes + 4 * 1024 * 1024)))

    # Advisory cost estimate: ~0.5 flop/byte -> HBM-bandwidth bound.
    matmul_flops = B * (4 * C * L * (H + W) + 4 * Cr * C * (H + W))
    cost = pl.CostEstimate(
        flops=matmul_flops + 3 * B * C * L,
        transcendentals=B * C * (H + W),
        bytes_accessed=2 * B * C * L * x.dtype.itemsize,
    )

    out2 = pl.pallas_call(
        _ca_kernel,
        out_shape=jax.ShapeDtypeStruct((B, C, L), x.dtype),
        grid_spec=pltpu.PrefetchScalarGridSpec(
            num_scalar_prefetch=0,
            grid=grid,
            in_specs=[
                pl.BlockSpec((bb, C, L), lambda b: (b, 0, 0)),
                pl.BlockSpec((Cr, C), lambda b: (0, 0)),
                pl.BlockSpec((C, Cr), lambda b: (0, 0)),
                pl.BlockSpec((C, Cr), lambda b: (0, 0)),
                pl.BlockSpec((L, H), lambda b: (0, 0)),
                pl.BlockSpec((L, W), lambda b: (0, 0)),
                pl.BlockSpec((H, L), lambda b: (0, 0)),
                pl.BlockSpec((W, L), lambda b: (0, 0)),
            ],
            out_specs=pl.BlockSpec((bb, C, L), lambda b: (b, 0, 0)),
        ),
        compiler_params=pltpu.CompilerParams(
            dimension_semantics=("parallel",),
            vmem_limit_bytes=vmem_limit,
        ),
        cost_estimate=cost,
    )(x2, w1, wh, ww, p_h, p_w, e_h, e_w)

    return out2.reshape(B, C, H, W)


def _reference(x, w1, wh, ww):
    # Pure-JAX reference mirroring the PyTorch forward.
    H = x.shape[2]
    x_h = jnp.mean(x, axis=3)                              # (B, C, H)
    x_w = jnp.mean(x, axis=2)                              # (B, C, W)
    cat = jnp.concatenate([x_h, x_w], axis=2)              # (B, C, H+W)
    y = jnp.maximum(jnp.einsum('rc,bcl->brl', w1, cat), 0.0)
    y_h, y_w = y[:, :, :H], y[:, :, H:]
    s_h = jax.nn.sigmoid(jnp.einsum('cr,brh->bch', wh, y_h))  # (B, C, H)
    s_w = jax.nn.sigmoid(jnp.einsum('cr,brw->bcw', ww, y_w))  # (B, C, W)
    return x * s_h[:, :, :, None] * s_w[:, :, None, :] + x


if __name__ == "__main__":
    # Module hyperparameters (small, consistent with the forward pass).
    B, C, H, W = 2, 32, 16, 16
    reduction = 8
    Cr = C // reduction

    key = jax.random.PRNGKey(0)
    kx, k1, k2, k3 = jax.random.split(key, 4)
    x = jax.random.normal(kx, (B, C, H, W), dtype=jnp.float32)
    # 1x1 convs (kernel_size=1, bias=False) are plain matmuls over channels.
    w1 = 0.1 * jax.random.normal(k1, (Cr, C), dtype=jnp.float32)  # conv_1x1
    wh = 0.1 * jax.random.normal(k2, (C, Cr), dtype=jnp.float32)  # F_h
    ww = 0.1 * jax.random.normal(k3, (C, Cr), dtype=jnp.float32)  # F_w

    out = ca_module_forward(x, w1, wh, ww)
    out = jax.block_until_ready(out)

    ref = _reference(x, w1, wh, ww)
    assert out.shape == (B, C, H, W)
    # f32-level accuracy; small margin for MXU pass-count differences across
    # TPU generations.
    assert jnp.allclose(out, ref, atol=1e-4, rtol=1e-4), "mismatch vs reference"

    print("KERNEL_OK")
</pallas_src>

<mosaic_0001>
module attributes {stable_mosaic.version = 11 : i64} {
  func.func @_ca_kernel(%arg0: i32, %arg1: memref<1x32x256xf32, #tpu.memory_space<vmem>>, %arg2: memref<4x32xf32, #tpu.memory_space<vmem>>, %arg3: memref<32x4xf32, #tpu.memory_space<vmem>>, %arg4: memref<32x4xf32, #tpu.memory_space<vmem>>, %arg5: memref<256x16xf32, #tpu.memory_space<vmem>>, %arg6: memref<256x16xf32, #tpu.memory_space<vmem>>, %arg7: memref<16x256xf32, #tpu.memory_space<vmem>>, %arg8: memref<16x256xf32, #tpu.memory_space<vmem>>, %arg9: memref<1x32x256xf32, #tpu.memory_space<vmem>>) attributes {dimension_semantics = [#tpu.dimension_semantics<parallel>], iteration_bounds = array<i64: 2>, scalar_prefetch = 0 : i64, scratch_operands = 0 : i64, tpu.core_type = #tpu.core_type<tc>, window_params = [{transform_indices = @transform_0, window_bounds = array<i64: 1, 32, 256>}, {pipeline_mode = #tpu.pipeline_mode<synchronous>, transform_indices = @transform_1, window_bounds = array<i64: 4, 32>}, {pipeline_mode = #tpu.pipeline_mode<synchronous>, transform_indices = @transform_2, window_bounds = array<i64: 32, 4>}, {pipeline_mode = #tpu.pipeline_mode<synchronous>, transform_indices = @transform_3, window_bounds = array<i64: 32, 4>}, {pipeline_mode = #tpu.pipeline_mode<synchronous>, transform_indices = @transform_4, window_bounds = array<i64: 256, 16>}, {pipeline_mode = #tpu.pipeline_mode<synchronous>, transform_indices = @transform_5, window_bounds = array<i64: 256, 16>}, {pipeline_mode = #tpu.pipeline_mode<synchronous>, transform_indices = @transform_6, window_bounds = array<i64: 16, 256>}, {pipeline_mode = #tpu.pipeline_mode<synchronous>, transform_indices = @transform_7, window_bounds = array<i64: 16, 256>}, {transform_indices = @transform_8, window_bounds = array<i64: 1, 32, 256>}]} {
    %c0 = arith.constant 0 : index
    %c0_0 = arith.constant 0 : index
    %0 = vector.load %arg2[%c0, %c0_0] : memref<4x32xf32, #tpu.memory_space<vmem>>, vector<4x32xf32>
    %c0_1 = arith.constant 0 : index
    %c0_2 = arith.constant 0 : index
    %1 = vector.load %arg3[%c0_1, %c0_2] : memref<32x4xf32, #tpu.memory_space<vmem>>, vector<32x4xf32>
    %c0_3 = arith.constant 0 : index
    %c0_4 = arith.constant 0 : index
    %2 = vector.load %arg4[%c0_3, %c0_4] : memref<32x4xf32, #tpu.memory_space<vmem>>, vector<32x4xf32>
    %c0_5 = arith.constant 0 : index
    %c0_6 = arith.constant 0 : index
    %3 = vector.load %arg5[%c0_5, %c0_6] : memref<256x16xf32, #tpu.memory_space<vmem>>, vector<256x16xf32>
    %c0_7 = arith.constant 0 : index
    %c0_8 = arith.constant 0 : index
    %4 = vector.load %arg6[%c0_7, %c0_8] : memref<256x16xf32, #tpu.memory_space<vmem>>, vector<256x16xf32>
    %c0_9 = arith.constant 0 : index
    %c0_10 = arith.constant 0 : index
    %5 = vector.load %arg7[%c0_9, %c0_10] : memref<16x256xf32, #tpu.memory_space<vmem>>, vector<16x256xf32>
    %c0_11 = arith.constant 0 : index
    %c0_12 = arith.constant 0 : index
    %6 = vector.load %arg8[%c0_11, %c0_12] : memref<16x256xf32, #tpu.memory_space<vmem>>, vector<16x256xf32>
    %c0_13 = arith.constant 0 : index
    %c0_14 = arith.constant 0 : index
    %c0_15 = arith.constant 0 : index
    %7 = vector.load %arg1[%c0_13, %c0_14, %c0_15] : memref<1x32x256xf32, #tpu.memory_space<vmem>>, vector<1x32x256xf32>
    %8 = vector.shape_cast %7 : vector<1x32x256xf32> to vector<32x256xf32>
    %cst = arith.constant dense<0.000000e+00> : vector<32x16xf32>
    %9 = tpu.matmul %8, %3, %cst {dimension_numbers = #tpu.dot_dimension_numbers<[1], [0], [0], [1], [0, 0, 1, 1], [], []>} : vector<32x256xf32>, vector<256x16xf32>, vector<32x16xf32> -> vector<32x16xf32>
    %cst_16 = arith.constant dense<0.000000e+00> : vector<32x16xf32>
    %10 = tpu.matmul %8, %4, %cst_16 {dimension_numbers = #tpu.dot_dimension_numbers<[1], [0], [0], [1], [0, 0, 1, 1], [], []>} : vector<32x256xf32>, vector<256x16xf32>, vector<32x16xf32> -> vector<32x16xf32>
    %cst_17 = arith.constant dense<0.000000e+00> : vector<4x16xf32>
    %11 = tpu.matmul %0, %9, %cst_17 {dimension_numbers = #tpu.dot_dimension_numbers<[1], [0], [0], [1], [0, 0, 1, 1], [], []>} : vector<4x32xf32>, vector<32x16xf32>, vector<4x16xf32> -> vector<4x16xf32>
    %cst_18 = arith.constant 0.000000e+00 : f32
    %12 = vector.broadcast %cst_18 : f32 to vector<4x16xf32>
    %13 = arith.maximumf %11, %12 : vector<4x16xf32>
    %cst_19 = arith.constant dense<0.000000e+00> : vector<4x16xf32>
    %14 = tpu.matmul %0, %10, %cst_19 {dimension_numbers = #tpu.dot_dimension_numbers<[1], [0], [0], [1], [0, 0, 1, 1], [], []>} : vector<4x32xf32>, vector<32x16xf32>, vector<4x16xf32> -> vector<4x16xf32>
    %cst_20 = arith.constant 0.000000e+00 : f32
    %15 = vector.broadcast %cst_20 : f32 to vector<4x16xf32>
    %16 = arith.maximumf %14, %15 : vector<4x16xf32>
    %cst_21 = arith.constant dense<0.000000e+00> : vector<32x16xf32>
    %17 = tpu.matmul %1, %13, %cst_21 {dimension_numbers = #tpu.dot_dimension_numbers<[1], [0], [0], [1], [0, 0, 1, 1], [], []>} : vector<32x4xf32>, vector<4x16xf32>, vector<32x16xf32> -> vector<32x16xf32>
    %18 = arith.negf %17 : vector<32x16xf32>
    %19 = math.exp %18 : vector<32x16xf32>
    %cst_22 = arith.constant 1.000000e+00 : f32
    %20 = vector.broadcast %cst_22 : f32 to vector<32x16xf32>
    %21 = arith.addf %20, %19 : vector<32x16xf32>
    %22 = arith.divf %20, %21 : vector<32x16xf32>
    %cst_23 = arith.constant dense<0.000000e+00> : vector<32x16xf32>
    %23 = tpu.matmul %2, %16, %cst_23 {dimension_numbers = #tpu.dot_dimension_numbers<[1], [0], [0], [1], [0, 0, 1, 1], [], []>} : vector<32x4xf32>, vector<4x16xf32>, vector<32x16xf32> -> vector<32x16xf32>
    %24 = arith.negf %23 : vector<32x16xf32>
    %25 = math.exp %24 : vector<32x16xf32>
    %cst_24 = arith.constant 1.000000e+00 : f32
    %26 = vector.broadcast %cst_24 : f32 to vector<32x16xf32>
    %27 = arith.addf %26, %25 : vector<32x16xf32>
    %28 = arith.divf %26, %27 : vector<32x16xf32>
    %cst_25 = arith.constant dense<0.000000e+00> : vector<32x256xf32>
    %29 = tpu.matmul %22, %5, %cst_25 {dimension_numbers = #tpu.dot_dimension_numbers<[1], [0], [0], [1], [0, 0, 1, 1], [], []>} : vector<32x16xf32>, vector<16x256xf32>, vector<32x256xf32> -> vector<32x256xf32>
    %cst_26 = arith.constant dense<0.000000e+00> : vector<32x256xf32>
    %30 = tpu.matmul %28, %6, %cst_26 {dimension_numbers = #tpu.dot_dimension_numbers<[1], [0], [0], [1], [0, 0, 1, 1], [], []>} : vector<32x16xf32>, vector<16x256xf32>, vector<32x256xf32> -> vector<32x256xf32>
    %31 = arith.mulf %29, %30 : vector<32x256xf32>
    %cst_27 = arith.constant 1.000000e+00 : f32
    %32 = vector.broadcast %cst_27 : f32 to vector<32x256xf32>
    %33 = arith.addf %31, %32 : vector<32x256xf32>
    %34 = arith.mulf %8, %33 : vector<32x256xf32>
    %c0_28 = arith.constant 0 : index
    %c0_29 = arith.constant 0 : index
    %c0_30 = arith.constant 0 : index
    %35 = vector.load %arg9[%c0_28, %c0_29, %c0_30] : memref<1x32x256xf32, #tpu.memory_space<vmem>>, vector<1x32x256xf32>
    %36 = vector.shape_cast %35 : vector<1x32x256xf32> to vector<32x256xf32>
    %37 = vector.shape_cast %34 : vector<32x256xf32> to vector<1x32x256xf32>
    tpu.vector_store %arg9[%c0_28, %c0_29, %c0_30], %37 {strides = array<i32>} : memref<1x32x256xf32, #tpu.memory_space<vmem>>, vector<1x32x256xf32>,
    return
  }
  func.func @transform_0(%arg0: i32) -> (i32, i32, i32) {
    %c0_i32 = arith.constant 0 : i32
    %c0_i32_0 = arith.constant 0 : i32
    %c0_i32_1 = arith.constant 0 : i32
    return %arg0, %c0_i32, %c0_i32_0 : i32, i32, i32
  }
  func.func @transform_1(%arg0: i32) -> (i32, i32) {
    %c0_i32 = arith.constant 0 : i32
    %c0_i32_0 = arith.constant 0 : i32
    %c0_i32_1 = arith.constant 0 : i32
    return %c0_i32, %c0_i32_0 : i32, i32
  }
  func.func @transform_2(%arg0: i32) -> (i32, i32) {
    %c0_i32 = arith.constant 0 : i32
    %c0_i32_0 = arith.constant 0 : i32
    %c0_i32_1 = arith.constant 0 : i32
    return %c0_i32, %c0_i32_0 : i32, i32
  }
  func.func @transform_3(%arg0: i32) -> (i32, i32) {
    %c0_i32 = arith.constant 0 : i32
    %c0_i32_0 = arith.constant 0 : i32
    %c0_i32_1 = arith.constant 0 : i32
    return %c0_i32, %c0_i32_0 : i32, i32
  }
  func.func @transform_4(%arg0: i32) -> (i32, i32) {
    %c0_i32 = arith.constant 0 : i32
    %c0_i32_0 = arith.constant 0 : i32
    %c0_i32_1 = arith.constant 0 : i32
    return %c0_i32, %c0_i32_0 : i32, i32
  }
  func.func @transform_5(%arg0: i32) -> (i32, i32) {
    %c0_i32 = arith.constant 0 : i32
    %c0_i32_0 = arith.constant 0 : i32
    %c0_i32_1 = arith.constant 0 : i32
    return %c0_i32, %c0_i32_0 : i32, i32
  }
  func.func @transform_6(%arg0: i32) -> (i32, i32) {
    %c0_i32 = arith.constant 0 : i32
    %c0_i32_0 = arith.constant 0 : i32
    %c0_i32_1 = arith.constant 0 : i32
    return %c0_i32, %c0_i32_0 : i32, i32
  }
  func.func @transform_7(%arg0: i32) -> (i32, i32) {
    %c0_i32 = arith.constant 0 : i32
    %c0_i32_0 = arith.constant 0 : i32
    %c0_i32_1 = arith.constant 0 : i32
    return %c0_i32, %c0_i32_0 : i32, i32
  }
  func.func @transform_8(%arg0: i32) -> (i32, i32, i32) {
    %c0_i32 = arith.constant 0 : i32
    %c0_i32_0 = arith.constant 0 : i32
    %c0_i32_1 = arith.constant 0 : i32
    return %arg0, %c0_i32, %c0_i32_0 : i32, i32, i32
  }
}

</mosaic_0001>

<llo_original>
// kernel: tpu_custom_call.1
$region0: #{tpu_custom_call.1}
  #allocation0 [shape = 'u32[]', space=smem, size = 0x4, offset = 0x4, fixed_abs, tag = 'smem constant byte address 0x4 - core index']
  #allocation1 [shape = 'u32[72,128]{1,0:T(1,128)}', space=vmem, size = 0x9000, scoped, tag = 'internal scratch']
  %s0 = inlined_call_operand.vmem [shape: f32[2,32,256], index: 0, kind: input, shape index: {}]
  %s1 = inlined_call_operand.vmem [shape: f32[4,32], index: 1, kind: input, shape index: {}]
  %s2 = inlined_call_operand.vmem [shape: f32[32,4], index: 2, kind: input, shape index: {}]
  %s3 = inlined_call_operand.vmem [shape: f32[32,4], index: 3, kind: input, shape index: {}]
  %s4 = inlined_call_operand.vmem [shape: f32[256,16], index: 4, kind: input, shape index: {}]
  %s5 = inlined_call_operand.vmem [shape: f32[256,16], index: 5, kind: input, shape index: {}]
  %s6 = inlined_call_operand.vmem [shape: f32[16,256], index: 6, kind: input, shape index: {}]
  %s7 = inlined_call_operand.vmem [shape: f32[16,256], index: 7, kind: input, shape index: {}]
  %s8 = inlined_call_operand.hbm [shape: f32[2,32,256], index: 8, kind: output, shape index: {}]
  %s9 = sld [smem:[#allocation0]]
  $region65: #{tpu_custom_call.1} parent=0
    _
  %s11 = ssub.s32 1, %s9
  %s12 = scalar_select 0, %s11, %s9
  $region1: #{tpu_custom_call.1} parent=0
    #allocation2 [shape = 'u8[65536]{0}', space=vmem, size = 0x10000, scoped, tag = 'output window, operand 0']
    #allocation3 [shape = 's32[2]{0}', space=sflag, size = 0x8, scoped, tag = 'scoped memory for tpu_custom_call.1']
    %13 = vsyncpa [#allocation3], 0
    %s14 = scalar_lea.sflag [#allocation3], 1
    %15 = vsyncpa %s14, 0
    loop: start=0, step=1, limit=4
    $region2: #{tpu_custom_call.1} parent=1 // loop_pre_header
      _
    $region3: #{tpu_custom_call.1} parent=1 // loop_header
      %s17 = sphi 0, %s21
      %p18 = scmp.ge.s32.totalorder %s17, 4
      %s27 = sphi 0, %s29
      %s30 = sphi 0, %s27
      %s31 = sphi 0, %s30
      %s47 = sphi 0, %s31
      %s51 = sphi 0, %s51
      %s53 = sphi 0, %s51
      %s54 = sphi 0, %s53
      %s68 = sphi 0, %s54
      %s72 = sphi 0, %s72
      %s74 = sphi 0, %s72
      %s75 = sphi 0, %s74
      %s89 = sphi 0, %s75
      %s93 = sphi 0, %s93
      %s95 = sphi 0, %s93
      %s96 = sphi 0, %s95
      %s110 = sphi 0, %s96
      %s114 = sphi 0, %s114
      %s116 = sphi 0, %s114
      %s117 = sphi 0, %s116
      %s131 = sphi 0, %s117
      %s135 = sphi 0, %s135
      %s137 = sphi 0, %s135
      %s138 = sphi 0, %s137
      %s152 = sphi 0, %s138
      %s156 = sphi 0, %s156
      %s158 = sphi 0, %s156
      %s159 = sphi 0, %s158
      %s173 = sphi 0, %s159
      %s177 = sphi 0, %s177
      %s179 = sphi 0, %s177
      %s180 = sphi 0, %s179
      %s194 = sphi 0, %s180
      %s200 = sphi 0, %s202
      %s203 = sphi 0, %s200
      %s204 = sphi 0, %s203
      %s220 = sphi 0, %s204
    $region4: #{tpu_custom_call.1} parent=1 // loop_header_branch
      %20 = sbr.rel (%p18) target = $region8
    $region5: #{tpu_custom_call.1} parent=1 // loop_body
      %s22 = ssub.s32 %s17, 1
      %s23 = ssub.s32 %s17, 2
      %s24 = sadd.s32 %s17, 1
      %s25 = ssub.s32 %s17, %s24
      %p26 = scmp.eq.s32.totalorder %s25, 0
      %s28 = sadd.s32 %s27, 1
      %s29 = scalar_select %p26, %s27, %s28
      %p32 = pneg %p26
      %p33 = scmp.eq.s32.totalorder %s17, 1
      %p34 = por %p32, %p33
      %p35 = scmp.ne.s32.totalorder %s27, %s30
      %p36 = scmp.eq.s32.totalorder %s17, 0
      %p37 = por %p35, %p36
      %p38 = scmp.ne.s32.totalorder %s27, %s30
      %p39 = scmp.eq.s32.totalorder %s22, 1
      %p40 = por %p38, %p39
      %p41 = scmp.ne.s32.totalorder %s30, %s31
      %p42 = scmp.eq.s32.totalorder %s22, 0
      %p43 = por %p41, %p42
      %p44 = scmp.ne.s32.totalorder %s30, %s31
      %p45 = scmp.eq.s32.totalorder %s23, 1
      %p46 = por %p44, %p45
      %p48 = scmp.ne.s32.totalorder %s31, %s47
      %p49 = scmp.eq.s32.totalorder %s23, 0
      %p50 = por %p48, %p49
      %s52 = sadd.s32 %s51, 1
      %p55 = scmp.eq.s32.totalorder %s17, 1
      %p56 = scmp.ne.s32.totalorder %s51, %s53
      %p57 = scmp.eq.s32.totalorder %s17, 0
      %p58 = por %p56, %p57
      %p59 = scmp.ne.s32.totalorder %s51, %s53
      %p60 = scmp.eq.s32.totalorder %s22, 1
      %p61 = por %p59, %p60
      %p62 = scmp.ne.s32.totalorder %s53, %s54
      %p63 = scmp.eq.s32.totalorder %s22, 0
      %p64 = por %p62, %p63
      %p65 = scmp.ne.s32.totalorder %s53, %s54
      %p66 = scmp.eq.s32.totalorder %s23, 1
      %p67 = por %p65, %p66
      %p69 = scmp.ne.s32.totalorder %s54, %s68
      %p70 = scmp.eq.s32.totalorder %s23, 0
      %p71 = por %p69, %p70
      %s73 = sadd.s32 %s72, 1
      %p76 = scmp.eq.s32.totalorder %s17, 1
      %p77 = scmp.ne.s32.totalorder %s72, %s74
      %p78 = scmp.eq.s32.totalorder %s17, 0
      %p79 = por %p77, %p78
      %p80 = scmp.ne.s32.totalorder %s72, %s74
      %p81 = scmp.eq.s32.totalorder %s22, 1
      %p82 = por %p80, %p81
      %p83 = scmp.ne.s32.totalorder %s74, %s75
      %p84 = scmp.eq.s32.totalorder %s22, 0
      %p85 = por %p83, %p84
      %p86 = scmp.ne.s32.totalorder %s74, %s75
      %p87 = scmp.eq.s32.totalorder %s23, 1
      %p88 = por %p86, %p87
      %p90 = scmp.ne.s32.totalorder %s75, %s89
      %p91 = scmp.eq.s32.totalorder %s23, 0
      %p92 = por %p90, %p91
      %s94 = sadd.s32 %s93, 1
      %p97 = scmp.eq.s32.totalorder %s17, 1
      %p98 = scmp.ne.s32.totalorder %s93, %s95
      %p99 = scmp.eq.s32.totalorder %s17, 0
      %p100 = por %p98, %p99
      %p101 = scmp.ne.s32.totalorder %s93, %s95
      %p102 = scmp.eq.s32.totalorder %s22, 1
      %p103 = por %p101, %p102
      %p104 = scmp.ne.s32.totalorder %s95, %s96
      %p105 = scmp.eq.s32.totalorder %s22, 0
      %p106 = por %p104, %p105
      %p107 = scmp.ne.s32.totalorder %s95, %s96
      %p108 = scmp.eq.s32.totalorder %s23, 1
      %p109 = por %p107, %p108
      %p111 = scmp.ne.s32.totalorder %s96, %s110
      %p112 = scmp.eq.s32.totalorder %s23, 0
      %p113 = por %p111, %p112
      %s115 = sadd.s32 %s114, 1
      %p118 = scmp.eq.s32.totalorder %s17, 1
      %p119 = scmp.ne.s32.totalorder %s114, %s116
      %p120 = scmp.eq.s32.totalorder %s17, 0
      %p121 = por %p119, %p120
      %p122 = scmp.ne.s32.totalorder %s114, %s116
      %p123 = scmp.eq.s32.totalorder %s22, 1
      %p124 = por %p122, %p123
      %p125 = scmp.ne.s32.totalorder %s116, %s117
      %p126 = scmp.eq.s32.totalorder %s22, 0
      %p127 = por %p125, %p126
      %p128 = scmp.ne.s32.totalorder %s116, %s117
      %p129 = scmp.eq.s32.totalorder %s23, 1
      %p130 = por %p128, %p129
      %p132 = scmp.ne.s32.totalorder %s117, %s131
      %p133 = scmp.eq.s32.totalorder %s23, 0
      %p134 = por %p132, %p133
      %s136 = sadd.s32 %s135, 1
      %p139 = scmp.eq.s32.totalorder %s17, 1
      %p140 = scmp.ne.s32.totalorder %s135, %s137
      %p141 = scmp.eq.s32.totalorder %s17, 0
      %p142 = por %p140, %p141
      %p143 = scmp.ne.s32.totalorder %s135, %s137
      %p144 = scmp.eq.s32.totalorder %s22, 1
      %p145 = por %p143, %p144
      %p146 = scmp.ne.s32.totalorder %s137, %s138
      %p147 = scmp.eq.s32.totalorder %s22, 0
      %p148 = por %p146, %p147
      %p149 = scmp.ne.s32.totalorder %s137, %s138
      %p150 = scmp.eq.s32.totalorder %s23, 1
      %p151 = por %p149, %p150
      %p153 = scmp.ne.s32.totalorder %s138, %s152
      %p154 = scmp.eq.s32.totalorder %s23, 0
      %p155 = por %p153, %p154
      %s157 = sadd.s32 %s156, 1
      %p160 = scmp.eq.s32.totalorder %s17, 1
      %p161 = scmp.ne.s32.totalorder %s156, %s158
      %p162 = scmp.eq.s32.totalorder %s17, 0
      %p163 = por %p161, %p162
      %p164 = scmp.ne.s32.totalorder %s156, %s158
      %p165 = scmp.eq.s32.totalorder %s22, 1
      %p166 = por %p164, %p165
      %p167 = scmp.ne.s32.totalorder %s158, %s159
      %p168 = scmp.eq.s32.totalorder %s22, 0
      %p169 = por %p167, %p168
      %p170 = scmp.ne.s32.totalorder %s158, %s159
      %p171 = scmp.eq.s32.totalorder %s23, 1
      %p172 = por %p170, %p171
      %p174 = scmp.ne.s32.totalorder %s159, %s173
      %p175 = scmp.eq.s32.totalorder %s23, 0
      %p176 = por %p174, %p175
      %s178 = sadd.s32 %s177, 1
      %p181 = scmp.eq.s32.totalorder %s17, 1
      %p182 = scmp.ne.s32.totalorder %s177, %s179
      %p183 = scmp.eq.s32.totalorder %s17, 0
      %p184 = por %p182, %p183
      %p185 = scmp.ne.s32.totalorder %s177, %s179
      %p186 = scmp.eq.s32.totalorder %s22, 1
      %p187 = por %p185, %p186
      %p188 = scmp.ne.s32.totalorder %s179, %s180
      %p189 = scmp.eq.s32.totalorder %s22, 0
      %p190 = por %p188, %p189
      %p191 = scmp.ne.s32.totalorder %s179, %s180
      %p192 = scmp.eq.s32.totalorder %s23, 1
      %p193 = por %p191, %p192
      %p195 = scmp.ne.s32.totalorder %s180, %s194
      %p196 = scmp.eq.s32.totalorder %s23, 0
      %p197 = por %p195, %p196
      %s198 = ssub.s32 %s17, %s24
      %p199 = scmp.eq.s32.totalorder %s198, 0
      %s201 = sadd.s32 %s200, 1
      %s202 = scalar_select %p199, %s200, %s201
      %p205 = pneg %p199
      %p206 = scmp.eq.s32.totalorder %s17, 1
      %p207 = por %p205, %p206
      %p208 = scmp.ne.s32.totalorder %s200, %s203
      %p209 = scmp.eq.s32.totalorder %s17, 0
      %p210 = por %p208, %p209
      %p211 = scmp.ne.s32.totalorder %s200, %s203
      %p212 = scmp.eq.s32.totalorder %s22, 1
      %p213 = por %p211, %p212
      %p214 = scmp.ne.s32.totalorder %s203, %s204
      %p215 = scmp.eq.s32.totalorder %s22, 0
      %p216 = por %p214, %p215
      %p217 = scmp.ne.s32.totalorder %s203, %s204
      %p218 = scmp.eq.s32.totalorder %s23, 1
      %p219 = por %p217, %p218
      %p221 = scmp.ne.s32.totalorder %s204, %s220
      %p222 = scmp.eq.s32.totalorder %s23, 0
      %p223 = por %p221, %p222
      %p224 = scmp.le.s32.totalorder 1, %s17
      %p225 = scmp.lt.s32.totalorder %s17, 3
      %p226 = pnand %p224, %p225
      %p227 = pneg %p226
      // Predicated region
      $region9: #{tpu_custom_call.1} parent=5 // pred_check
        _
      $region10: #{tpu_custom_call.1} parent=5 // pred_check_branch
        %229 = sbr.rel (%p226) target = $region12
      $region11: #{tpu_custom_call.1} parent=5 // pred_region
        %s230 = ssub.s32 %s17, 1
        // Predicated region
        $region13: #{tpu_custom_call.1} parent=11 // pred_check
          %p231 = pneg %p64
        $region14: #{tpu_custom_call.1} parent=11 // pred_check_branch
          %233 = sbr.rel (%p231) target = $region16
        $region15: #{tpu_custom_call.1} parent=11 // pred_region
          _
        $region16: #{tpu_custom_call.1} parent=11 // pred_fallthru
          _
        // Predicated region
        $region17: #{tpu_custom_call.1} parent=11 // pred_check
          %p234 = pneg %p85
        $region18: #{tpu_custom_call.1} parent=11 // pred_check_branch
          %236 = sbr.rel (%p234) target = $region20
        $region19: #{tpu_custom_call.1} parent=11 // pred_region
          _
        $region20: #{tpu_custom_call.1} parent=11 // pred_fallthru
          _
        // Predicated region
        $region21: #{tpu_custom_call.1} parent=11 // pred_check
          %p237 = pneg %p106
        $region22: #{tpu_custom_call.1} parent=11 // pred_check_branch
          %239 = sbr.rel (%p237) target = $region24
        $region23: #{tpu_custom_call.1} parent=11 // pred_region
          _
        $region24: #{tpu_custom_call.1} parent=11 // pred_fallthru
          _
        // Predicated region
        $region25: #{tpu_custom_call.1} parent=11 // pred_check
          %p240 = pneg %p127
        $region26: #{tpu_custom_call.1} parent=11 // pred_check_branch
          %242 = sbr.rel (%p240) target = $region28
        $region27: #{tpu_custom_call.1} parent=11 // pred_region
          _
        $region28: #{tpu_custom_call.1} parent=11 // pred_fallthru
          _
        // Predicated region
        $region29: #{tpu_custom_call.1} parent=11 // pred_check
          %p243 = pneg %p148
        $region30: #{tpu_custom_call.1} parent=11 // pred_check_branch
          %245 = sbr.rel (%p243) target = $region32
        $region31: #{tpu_custom_call.1} parent=11 // pred_region
          _
        $region32: #{tpu_custom_call.1} parent=11 // pred_fallthru
          _
        // Predicated region
        $region33: #{tpu_custom_call.1} parent=11 // pred_check
          %p246 = pneg %p169
        $region34: #{tpu_custom_call.1} parent=11 // pred_check_branch
          %248 = sbr.rel (%p246) target = $region36
        $region35: #{tpu_custom_call.1} parent=11 // pred_region
          _
        $region36: #{tpu_custom_call.1} parent=11 // pred_fallthru
          _
        // Predicated region
        $region37: #{tpu_custom_call.1} parent=11 // pred_check
          %p249 = pneg %p190
        $region38: #{tpu_custom_call.1} parent=11 // pred_check_branch
          %251 = sbr.rel (%p249) target = $region40
        $region39: #{tpu_custom_call.1} parent=11 // pred_region
          _
        $region40: #{tpu_custom_call.1} parent=11 // pred_fallthru
          _
      $region12: #{tpu_custom_call.1} parent=5 // pred_fallthru
        _
      %p252 = scmp.lt.s32.totalorder %s17, 2
      // Predicated region
      $region41: #{tpu_custom_call.1} parent=5 // pred_check
        %p253 = pneg %p252
      $region42: #{tpu_custom_call.1} parent=5 // pred_check_branch
        %255 = sbr.rel (%p253) target = $region44
      $region43: #{tpu_custom_call.1} parent=5 // pred_region
        // Predicated region
        $region45: #{tpu_custom_call.1} parent=43 // pred_check
          %p256 = pneg %p37
        $region46: #{tpu_custom_call.1} parent=43 // pred_check_branch
          %258 = sbr.rel (%p256) target = $region48
        $region47: #{tpu_custom_call.1} parent=43 // pred_region
          %p259 = scmp.lt.s32.totalorder %s17, 1
          %s260 = scalar_select %p259, %s17, 1
          %s261 = smul.addr %s260, 8
          %s262 = smul.addr %s261, 8
          %s263 = scalar_lea.vmem %s0, %s262
        $region48: #{tpu_custom_call.1} parent=43 // pred_fallthru
          _
      $region44: #{tpu_custom_call.1} parent=5 // pred_fallthru
        _
      %p264 = scmp.le.s32.totalorder 1, %s17
      %p265 = scmp.lt.s32.totalorder %s17, 3
      %p266 = pnand %p264, %p265
      %p267 = pneg %p266
      // Predicated region
      $region49: #{tpu_custom_call.1} parent=5 // pred_check
        _
      $region50: #{tpu_custom_call.1} parent=5 // pred_check_branch
        %269 = sbr.rel (%p266) target = $region52
      $region51: #{tpu_custom_call.1} parent=5 // pred_region
        %s270 = ssub.s32 %s17, 1
        %p271 = scmp.lt.s32.totalorder %s22, 1
        %s272 = scalar_select %p271, %s22, 1
        %s273 = smul.addr %s272, 8
        %s274 = smul.addr %s273, 8
        %s275 = scalar_lea.vmem %s0, %s274
        %p276 = pneg %p43
        %p277 = pneg %p40
        %p278 = pneg %p64
        %p279 = pneg %p61
        %p280 = pneg %p85
        %p281 = pneg %p82
        %p282 = pneg %p106
        %p283 = pneg %p103
        %p284 = pneg %p127
        %p285 = pneg %p124
        %p286 = pneg %p148
        %p287 = pneg %p145
        %p288 = pneg %p169
        %p289 = pneg %p166
        %p290 = pneg %p190
        %p291 = pneg %p187
        %p292 = pneg %p216
        %p293 = pneg %p213
        %s294 = sand.u32 %s203, 1
        %s295 = scalar_lea.sflag [#allocation3], %s294
        %s296 = sand.u32 %s203, 1
        %s297 = smul.addr %s296, 64
        %s298 = scalar_lea.vmem [#allocation2], %s297
        %p299 = scmp.lt.s32.totalorder %s22, 1
        %s300 = scalar_select %p299, %s22, 1
        %s301 = smul.addr %s300, 8
        %s302 = smul.addr %s301, 8
        %s303 = scalar_lea.vmem %s0, %s302
        %v304 = vld [vmem:[%s1] sm:$0xf]
        %v305 = vld [vmem:[%s2] sm:$0xff]
        %v306 = vld [vmem:[%s2 + $0x8] sm:$0xff]
        %v307 = vld [vmem:[%s2 + $0x10] sm:$0xff]
        %v308 = vld [vmem:[%s2 + $0x18] sm:$0xff]
        %v309 = vld [vmem:[%s3] sm:$0xff]
        %v310 = vld [vmem:[%s3 + $0x8] sm:$0xff]
        %v311 = vld [vmem:[%s3 + $0x10] sm:$0xff]
        %v312 = vld [vmem:[%s3 + $0x18] sm:$0xff]
        %v313 = vld [vmem:[%s4] sm:$0xff]
        %v314 = vld [vmem:[%s4 + $0x8] sm:$0xff]
        %v315 = vld [vmem:[%s4 + $0x10] sm:$0xff]
        %v316 = vld [vmem:[%s4 + $0x18] sm:$0xff]
        %v317 = vld [vmem:[%s4 + $0x20] sm:$0xff]
        %v318 = vld [vmem:[%s4 + $0x28] sm:$0xff]
        %v319 = vld [vmem:[%s4 + $0x30] sm:$0xff]
        %v320 = vld [vmem:[%s4 + $0x38] sm:$0xff]
        %v321 = vld [vmem:[%s4 + $0x40] sm:$0xff]
        %v322 = vld [vmem:[%s4 + $0x48] sm:$0xff]
        %v323 = vld [vmem:[%s4 + $0x50] sm:$0xff]
        %v324 = vld [vmem:[%s4 + $0x58] sm:$0xff]
        %v325 = vld [vmem:[%s4 + $0x60] sm:$0xff]
        %v326 = vld [vmem:[%s4 + $0x68] sm:$0xff]
        %v327 = vld [vmem:[%s4 + $0x70] sm:$0xff]
        %v328 = vld [vmem:[%s4 + $0x78] sm:$0xff]
        %v329 = vld [vmem:[%s4 + $0x80] sm:$0xff]
        %v330 = vld [vmem:[%s4 + $0x88] sm:$0xff]
        %v331 = vld [vmem:[%s4 + $0x90] sm:$0xff]
        %v332 = vld [vmem:[%s4 + $0x98] sm:$0xff]
        %v333 = vld [vmem:[%s4 + $0xa0] sm:$0xff]
        %v334 = vld [vmem:[%s4 + $0xa8] sm:$0xff]
        %v335 = vld [vmem:[%s4 + $0xb0] sm:$0xff]
        %v336 = vld [vmem:[%s4 + $0xb8] sm:$0xff]
        %v337 = vld [vmem:[%s4 + $0xc0] sm:$0xff]
        %v338 = vld [vmem:[%s4 + $0xc8] sm:$0xff]
        %v339 = vld [vmem:[%s4 + $0xd0] sm:$0xff]
        %v340 = vld [vmem:[%s4 + $0xd8] sm:$0xff]
        %v341 = vld [vmem:[%s4 + $0xe0] sm:$0xff]
        %v342 = vld [vmem:[%s4 + $0xe8] sm:$0xff]
        %v343 = vld [vmem:[%s4 + $0xf0] sm:$0xff]
        %v344 = vld [vmem:[%s4 + $0xf8] sm:$0xff]
        %v345 = vld [vmem:[%s5] sm:$0xff]
        %v346 = vld [vmem:[%s5 + $0x8] sm:$0xff]
        %v347 = vld [vmem:[%s5 + $0x10] sm:$0xff]
        %v348 = vld [vmem:[%s5 + $0x18] sm:$0xff]
        %v349 = vld [vmem:[%s5 + $0x20] sm:$0xff]
        %v350 = vld [vmem:[%s5 + $0x28] sm:$0xff]
        %v351 = vld [vmem:[%s5 + $0x30] sm:$0xff]
        %v352 = vld [vmem:[%s5 + $0x38] sm:$0xff]
        %v353 = vld [vmem:[%s5 + $0x40] sm:$0xff]
        %v354 = vld [vmem:[%s5 + $0x48] sm:$0xff]
        %v355 = vld [vmem:[%s5 + $0x50] sm:$0xff]
        %v356 = vld [vmem:[%s5 + $0x58] sm:$0xff]
        %v357 = vld [vmem:[%s5 + $0x60] sm:$0xff]
        %v358 = vld [vmem:[%s5 + $0x68] sm:$0xff]
        %v359 = vld [vmem:[%s5 + $0x70] sm:$0xff]
        %v360 = vld [vmem:[%s5 + $0x78] sm:$0xff]
        %v361 = vld [vmem:[%s5 + $0x80] sm:$0xff]
        %v362 = vld [vmem:[%s5 + $0x88] sm:$0xff]
        %v363 = vld [vmem:[%s5 + $0x90] sm:$0xff]
        %v364 = vld [vmem:[%s5 + $0x98] sm:$0xff]
        %v365 = vld [vmem:[%s5 + $0xa0] sm:$0xff]
        %v366 = vld [vmem:[%s5 + $0xa8] sm:$0xff]
        %v367 = vld [vmem:[%s5 + $0xb0] sm:$0xff]
        %v368 = vld [vmem:[%s5 + $0xb8] sm:$0xff]
        %v369 = vld [vmem:[%s5 + $0xc0] sm:$0xff]
        %v370 = vld [vmem:[%s5 + $0xc8] sm:$0xff]
        %v371 = vld [vmem:[%s5 + $0xd0] sm:$0xff]
        %v372 = vld [vmem:[%s5 + $0xd8] sm:$0xff]
        %v373 = vld [vmem:[%s5 + $0xe0] sm:$0xff]
        %v374 = vld [vmem:[%s5 + $0xe8] sm:$0xff]
        %v375 = vld [vmem:[%s5 + $0xf0] sm:$0xff]
        %v376 = vld [vmem:[%s5 + $0xf8] sm:$0xff]
        %v377 = vld [vmem:[%s6] sm:$0xff]
        %v378 = vld [vmem:[%s6 + $0x8] sm:$0xff]
        %v379 = vld [vmem:[%s6 + $0x10] sm:$0xff]
        %v380 = vld [vmem:[%s6 + $0x18] sm:$0xff]
        %v381 = vld [vmem:[%s7] sm:$0xff]
        %v382 = vld [vmem:[%s7 + $0x8] sm:$0xff]
        %v383 = vld [vmem:[%s7 + $0x10] sm:$0xff]
        %v384 = vld [vmem:[%s7 + $0x18] sm:$0xff]
        %v385 = vld [vmem:[%s303] sm:$0xff]
        %v386 = vld [vmem:[%s303 + $0x8] sm:$0xff]
        %v387 = vld [vmem:[%s303 + $0x10] sm:$0xff]
        %v388 = vld [vmem:[%s303 + $0x18] sm:$0xff]
        %v389 = vld [vmem:[%s303 + $0x20] sm:$0xff]
        %v390 = vld [vmem:[%s303 + $0x28] sm:$0xff]
        %v391 = vld [vmem:[%s303 + $0x30] sm:$0xff]
        %v392 = vld [vmem:[%s303 + $0x38] sm:$0xff]
        %393 = vmatpush.msra.mxu0 %v328
        %394 = vmatpush.msra.mxu0 %v327
        %395 = vmatpush.msra.mxu0 %v326
        %396 = vmatpush.msra.mxu0 %v325
        %397 = vmatpush.msra.mxu0 %v324
        %398 = vmatpush.msra.mxu0 %v323
        %399 = vmatpush.msra.mxu0 %v322
        %400 = vmatpush.msra.mxu0 %v321
        %401 = vmatpush.msra.mxu0 %v320
        %402 = vmatpush.msra.mxu0 %v319
        %403 = vmatpush.msra.mxu0 %v318
        %404 = vmatpush.msra.mxu0 %v317
        %405 = vmatpush.msra.mxu0 %v316
        %406 = vmatpush.msra.mxu0 %v315
        %407 = vmatpush.msra.mxu0 %v314
        %408 = vmatpush.msra.mxu0 %v313
        %409 = vmatmul.f32.gmra.mxu0 %v385
        %v410 = vpop.f32.mrf.mxu0
        %v411 = vadd.f32 0.0, %v410
        %412 = vmatmul.f32.gmra.mxu0 %v387
        %v413 = vpop.f32.mrf.mxu0
        %v414 = vadd.f32 0.0, %v413
        %415 = vmatmul.f32.gmra.mxu0 %v389
        %v416 = vpop.f32.mrf.mxu0
        %v417 = vadd.f32 0.0, %v416
        %418 = vmatmul.f32.gmra.mxu0 %v391
        %v419 = vpop.f32.mrf.mxu0
        %v420 = vadd.f32 0.0, %v419
        %421 = vdwg.mxu0
        %422 = vmatpush.msra.mxu0 %v344
        %423 = vmatpush.msra.mxu0 %v343
        %424 = vmatpush.msra.mxu0 %v342
        %425 = vmatpush.msra.mxu0 %v341
        %426 = vmatpush.msra.mxu0 %v340
        %427 = vmatpush.msra.mxu0 %v339
        %428 = vmatpush.msra.mxu0 %v338
        %429 = vmatpush.msra.mxu0 %v337
        %430 = vmatpush.msra.mxu0 %v336
        %431 = vmatpush.msra.mxu0 %v335
        %432 = vmatpush.msra.mxu0 %v334
        %433 = vmatpush.msra.mxu0 %v333
        %434 = vmatpush.msra.mxu0 %v332
        %435 = vmatpush.msra.mxu0 %v331
        %436 = vmatpush.msra.mxu0 %v330
        %437 = vmatpush.msra.mxu0 %v329
        %438 = vmatmul.f32.gmra.mxu0 %v386
        %v439 = vpop.f32.mrf.mxu0
        %v440 = vadd.f32 %v411, %v439
        %441 = vmatmul.f32.gmra.mxu0 %v388
        %v442 = vpop.f32.mrf.mxu0
        %v443 = vadd.f32 %v414, %v442
        %444 = vmatmul.f32.gmra.mxu0 %v390
        %v445 = vpop.f32.mrf.mxu0
        %v446 = vadd.f32 %v417, %v445
        %447 = vmatmul.f32.gmra.mxu0 %v392
        %v448 = vpop.f32.mrf.mxu0
        %v449 = vadd.f32 %v420, %v448
        %450 = vdwg.mxu0
        %451 = vmatpush.msra.mxu0 %v360
        %452 = vmatpush.msra.mxu0 %v359
        %453 = vmatpush.msra.mxu0 %v358
        %454 = vmatpush.msra.mxu0 %v357
        %455 = vmatpush.msra.mxu0 %v356
        %456 = vmatpush.msra.mxu0 %v355
        %457 = vmatpush.msra.mxu0 %v354
        %458 = vmatpush.msra.mxu0 %v353
        %459 = vmatpush.msra.mxu0 %v352
        %460 = vmatpush.msra.mxu0 %v351
        %461 = vmatpush.msra.mxu0 %v350
        %462 = vmatpush.msra.mxu0 %v349
        %463 = vmatpush.msra.mxu0 %v348
        %464 = vmatpush.msra.mxu0 %v347
        %465 = vmatpush.msra.mxu0 %v346
        %466 = vmatpush.msra.mxu0 %v345
        %467 = vmatmul.f32.gmra.mxu0 %v385
        %v468 = vpop.f32.mrf.mxu0
        %v469 = vadd.f32 0.0, %v468
        %470 = vmatmul.f32.gmra.mxu0 %v387
        %v471 = vpop.f32.mrf.mxu0
        %v472 = vadd.f32 0.0, %v471
        %473 = vmatmul.f32.gmra.mxu0 %v389
        %v474 = vpop.f32.mrf.mxu0
        %v475 = vadd.f32 0.0, %v474
        %476 = vmatmul.f32.gmra.mxu0 %v391
        %v477 = vpop.f32.mrf.mxu0
        %v478 = vadd.f32 0.0, %v477
        %479 = vdwg.mxu0
        %480 = vmatpush.msra.mxu0 %v376
        %481 = vmatpush.msra.mxu0 %v375
        %482 = vmatpush.msra.mxu0 %v374
        %483 = vmatpush.msra.mxu0 %v373
        %484 = vmatpush.msra.mxu0 %v372
        %485 = vmatpush.msra.mxu0 %v371
        %486 = vmatpush.msra.mxu0 %v370
        %487 = vmatpush.msra.mxu0 %v369
        %488 = vmatpush.msra.mxu0 %v368
        %489 = vmatpush.msra.mxu0 %v367
        %490 = vmatpush.msra.mxu0 %v366
        %491 = vmatpush.msra.mxu0 %v365
        %492 = vmatpush.msra.mxu0 %v364
        %493 = vmatpush.msra.mxu0 %v363
        %494 = vmatpush.msra.mxu0 %v362
        %495 = vmatpush.msra.mxu0 %v361
        %496 = vmatmul.f32.gmra.mxu0 %v386
        %v497 = vpop.f32.mrf.mxu0
        %v498 = vadd.f32 %v469, %v497
        %499 = vmatmul.f32.gmra.mxu0 %v388
        %v500 = vpop.f32.mrf.mxu0
        %v501 = vadd.f32 %v472, %v500
        %502 = vmatmul.f32.gmra.mxu0 %v390
        %v503 = vpop.f32.mrf.mxu0
        %v504 = vadd.f32 %v475, %v503
        %505 = vmatmul.f32.gmra.mxu0 %v392
        %v506 = vpop.f32.mrf.mxu0
        %v507 = vadd.f32 %v478, %v506
        %508 = vdwg.mxu0
        %vm509 = vcmask 261120
        %v511 = vsel %vm509, %v304, 0
        %513 = vmatpush.msra.mxu0 0.0
        %514 = vmatpush.msra.mxu0 0.0
        %515 = vmatpush.msra.mxu0 0.0
        %516 = vmatpush.msra.mxu0 0.0
        %517 = vmatpush.msra.mxu0 0.0
        %518 = vmatpush.msra.mxu0 0.0
        %519 = vmatpush.msra.mxu0 0.0
        %520 = vmatpush.msra.mxu0 0.0
        %521 = vmatpush.msra.mxu0 0.0
        %522 = vmatpush.msra.mxu0 0.0
        %523 = vmatpush.msra.mxu0 0.0
        %524 = vmatpush.msra.mxu0 0.0
        %525 = vmatpush.msra.mxu0 %v449
        %526 = vmatpush.msra.mxu0 %v446
        %527 = vmatpush.msra.mxu0 %v443
        %528 = vmatpush.msra.mxu0 %v440
        %529 = vmatmul.f32.gmra.mxu0 %v511
        %v530 = vpop.f32.mrf.mxu0
        %v531 = vadd.f32 0.0, %v530
        %532 = vdwg.mxu0
        %v533 = vmax.f32 %v531, 0.0
        %534 = vmatpush.msra.mxu0 0.0
        %535 = vmatpush.msra.mxu0 0.0
        %536 = vmatpush.msra.mxu0 0.0
        %537 = vmatpush.msra.mxu0 0.0
        %538 = vmatpush.msra.mxu0 0.0
        %539 = vmatpush.msra.mxu0 0.0
        %540 = vmatpush.msra.mxu0 0.0
        %541 = vmatpush.msra.mxu0 0.0
        %542 = vmatpush.msra.mxu0 0.0
        %543 = vmatpush.msra.mxu0 0.0
        %544 = vmatpush.msra.mxu0 0.0
        %545 = vmatpush.msra.mxu0 0.0
        %546 = vmatpush.msra.mxu0 %v507
        %547 = vmatpush.msra.mxu0 %v504
        %548 = vmatpush.msra.mxu0 %v501
        %549 = vmatpush.msra.mxu0 %v498
        %550 = vmatmul.f32.gmra.mxu0 %v511
        %v551 = vpop.f32.mrf.mxu0
        %v552 = vadd.f32 0.0, %v551
        %553 = vdwg.mxu0
        %v554 = vmax.f32 %v552, 0.0
        %vm555 = vcmask 31744
        %v557 = vsel %vm555, %v305, 0
        %v560 = vsel %vm555, %v306, 0
        %v563 = vsel %vm555, %v307, 0
        %v566 = vsel %vm555, %v308, 0
        %vm568 = vcmask 1043456
        %v570 = vsel %vm568, %v533, 0
        %572 = vmatpush.msra.mxu0 0.0
        %573 = vmatpush.msra.mxu0 0.0
        %574 = vmatpush.msra.mxu0 0.0
        %575 = vmatpush.msra.mxu0 0.0
        %576 = vmatpush.msra.mxu0 0.0
        %577 = vmatpush.msra.mxu0 0.0
        %578 = vmatpush.msra.mxu0 0.0
        %579 = vmatpush.msra.mxu0 0.0
        %580 = vmatpush.msra.mxu0 0.0
        %581 = vmatpush.msra.mxu0 0.0
        %582 = vmatpush.msra.mxu0 0.0
        %583 = vmatpush.msra.mxu0 0.0
        %584 = vmatpush.msra.mxu0 0.0
        %585 = vmatpush.msra.mxu0 0.0
        %586 = vmatpush.msra.mxu0 0.0
        %587 = vmatpush.msra.mxu0 %v570
        %588 = vmatmul.f32.gmra.mxu0 %v557
        %v589 = vpop.f32.mrf.mxu0
        %v590 = vadd.f32 0.0, %v589
        %591 = vmatmul.f32.gmra.mxu0 %v560
        %v592 = vpop.f32.mrf.mxu0
        %v593 = vadd.f32 0.0, %v592
        %594 = vmatmul.f32.gmra.mxu0 %v563
        %v595 = vpop.f32.mrf.mxu0
        %v596 = vadd.f32 0.0, %v595
        %597 = vmatmul.f32.gmra.mxu0 %v566
        %v598 = vpop.f32.mrf.mxu0
        %v599 = vadd.f32 0.0, %v598
        %600 = vdwg.mxu0
        %v601 = vxor.u32 %v590, 2147483648
        %v602 = vxor.u32 %v593, 2147483648
        %v603 = vxor.u32 %v596, 2147483648
        %v604 = vxor.u32 %v599, 2147483648
        %v605 = vmul.f32 %v601, 1.442695
        %v606 = vpow.pop %v605
        %v607 = vmul.f32 %v602, 1.442695
        %v608 = vpow.pop %v607
        %v609 = vmul.f32 %v603, 1.442695
        %v610 = vpow.pop %v609
        %v611 = vmul.f32 %v604, 1.442695
        %v612 = vpow.pop %v611
        %v613 = vadd.f32 %v606, 1.0
        %v614 = vadd.f32 %v608, 1.0
        %v615 = vadd.f32 %v610, 1.0
        %v616 = vadd.f32 %v612, 1.0
        %v617 = vrcp.pop %v613
        %v618 = vmul.f32 %v613, %v617
        %v619 = vsub.f32 1.0, %v618
        %v620 = vmul.f32 %v617, %v619
        %v621 = vadd.f32 %v617, %v620
        %vm622 = vweird.f32 %v613
        %vm623 = vweird.f32 %v617
        %vm624 = vmor %vm622, %vm623
        %v625 = vsel %vm624, %v617, %v621
        %v626 = vand.u32 2147483647, %v613
        %vm627 = vcmp.eq.f32.partialorder %v626, 8.507059e+37
        %v628 = vand.u32 %v613, 2147483648
        %v629 = vor.u32 1.1754944e-38, %v628
        %v630 = vsel %vm627, %v629, %v625
        %v631 = vmul.f32 1.0, %v630
        %v632 = vrcp.pop %v614
        %v633 = vmul.f32 %v614, %v632
        %v634 = vsub.f32 1.0, %v633
        %v635 = vmul.f32 %v632, %v634
        %v636 = vadd.f32 %v632, %v635
        %vm637 = vweird.f32 %v614
        %vm638 = vweird.f32 %v632
        %vm639 = vmor %vm637, %vm638
        %v640 = vsel %vm639, %v632, %v636
        %v641 = vand.u32 2147483647, %v614
        %vm642 = vcmp.eq.f32.partialorder %v641, 8.507059e+37
        %v643 = vand.u32 %v614, 2147483648
        %v644 = vor.u32 1.1754944e-38, %v643
        %v645 = vsel %vm642, %v644, %v640
        %v646 = vmul.f32 1.0, %v645
        %v647 = vrcp.pop %v615
        %v648 = vmul.f32 %v615, %v647
        %v649 = vsub.f32 1.0, %v648
        %v650 = vmul.f32 %v647, %v649
        %v651 = vadd.f32 %v647, %v650
        %vm652 = vweird.f32 %v615
        %vm653 = vweird.f32 %v647
        %vm654 = vmor %vm652, %vm653
        %v655 = vsel %vm654, %v647, %v651
        %v656 = vand.u32 2147483647, %v615
        %vm657 = vcmp.eq.f32.partialorder %v656, 8.507059e+37
        %v658 = vand.u32 %v615, 2147483648
        %v659 = vor.u32 1.1754944e-38, %v658
        %v660 = vsel %vm657, %v659, %v655
        %v661 = vmul.f32 1.0, %v660
        %v662 = vrcp.pop %v616
        %v663 = vmul.f32 %v616, %v662
        %v664 = vsub.f32 1.0, %v663
        %v665 = vmul.f32 %v662, %v664
        %v666 = vadd.f32 %v662, %v665
        %vm667 = vweird.f32 %v616
        %vm668 = vweird.f32 %v662
        %vm669 = vmor %vm667, %vm668
        %v670 = vsel %vm669, %v662, %v666
        %v671 = vand.u32 2147483647, %v616
        %vm672 = vcmp.eq.f32.partialorder %v671, 8.507059e+37
        %v673 = vand.u32 %v616, 2147483648
        %v674 = vor.u32 1.1754944e-38, %v673
        %v675 = vsel %vm672, %v674, %v670
        %v676 = vmul.f32 1.0, %v675
        %v678 = vsel %vm555, %v309, 0
        %v681 = vsel %vm555, %v310, 0
        %v684 = vsel %vm555, %v311, 0
        %v687 = vsel %vm555, %v312, 0
        %v690 = vsel %vm568, %v554, 0
        %692 = vmatpush.msra.mxu0 0.0
        %693 = vmatpush.msra.mxu0 0.0
        %694 = vmatpush.msra.mxu0 0.0
        %695 = vmatpush.msra.mxu0 0.0
        %696 = vmatpush.msra.mxu0 0.0
        %697 = vmatpush.msra.mxu0 0.0
        %698 = vmatpush.msra.mxu0 0.0
        %699 = vmatpush.msra.mxu0 0.0
        %700 = vmatpush.msra.mxu0 0.0
        %701 = vmatpush.msra.mxu0 0.0
        %702 = vmatpush.msra.mxu0 0.0
        %703 = vmatpush.msra.mxu0 0.0
        %704 = vmatpush.msra.mxu0 0.0
        %705 = vmatpush.msra.mxu0 0.0
        %706 = vmatpush.msra.mxu0 0.0
        %707 = vmatpush.msra.mxu0 %v690
        %708 = vmatmul.f32.gmra.mxu0 %v678
        %v709 = vpop.f32.mrf.mxu0
        %v710 = vadd.f32 0.0, %v709
        %711 = vmatmul.f32.gmra.mxu0 %v681
        %v712 = vpop.f32.mrf.mxu0
        %v713 = vadd.f32 0.0, %v712
        %714 = vmatmul.f32.gmra.mxu0 %v684
        %v715 = vpop.f32.mrf.mxu0
        %v716 = vadd.f32 0.0, %v715
        %717 = vmatmul.f32.gmra.mxu0 %v687
        %v718 = vpop.f32.mrf.mxu0
        %v719 = vadd.f32 0.0, %v718
        %720 = vdwg.mxu0
        %v721 = vxor.u32 %v710, 2147483648
        %v722 = vxor.u32 %v713, 2147483648
        %v723 = vxor.u32 %v716, 2147483648
        %v724 = vxor.u32 %v719, 2147483648
        %v725 = vmul.f32 %v721, 1.442695
        %v726 = vpow.pop %v725
        %v727 = vmul.f32 %v722, 1.442695
        %v728 = vpow.pop %v727
        %v729 = vmul.f32 %v723, 1.442695
        %v730 = vpow.pop %v729
        %v731 = vmul.f32 %v724, 1.442695
        %v732 = vpow.pop %v731
        %v733 = vadd.f32 %v726, 1.0
        %v734 = vadd.f32 %v728, 1.0
        %v735 = vadd.f32 %v730, 1.0
        %v736 = vadd.f32 %v732, 1.0
        %v737 = vrcp.pop %v733
        %v738 = vmul.f32 %v733, %v737
        %v739 = vsub.f32 1.0, %v738
        %v740 = vmul.f32 %v737, %v739
        %v741 = vadd.f32 %v737, %v740
        %vm742 = vweird.f32 %v733
        %vm743 = vweird.f32 %v737
        %vm744 = vmor %vm742, %vm743
        %v745 = vsel %vm744, %v737, %v741
        %v746 = vand.u32 2147483647, %v733
        %vm747 = vcmp.eq.f32.partialorder %v746, 8.507059e+37
        %v748 = vand.u32 %v733, 2147483648
        %v749 = vor.u32 1.1754944e-38, %v748
        %v750 = vsel %vm747, %v749, %v745
        %v751 = vmul.f32 1.0, %v750
        %v752 = vrcp.pop %v734
        %v753 = vmul.f32 %v734, %v752
        %v754 = vsub.f32 1.0, %v753
        %v755 = vmul.f32 %v752, %v754
        %v756 = vadd.f32 %v752, %v755
        %vm757 = vweird.f32 %v734
        %vm758 = vweird.f32 %v752
        %vm759 = vmor %vm757, %vm758
        %v760 = vsel %vm759, %v752, %v756
        %v761 = vand.u32 2147483647, %v734
        %vm762 = vcmp.eq.f32.partialorder %v761, 8.507059e+37
        %v763 = vand.u32 %v734, 2147483648
        %v764 = vor.u32 1.1754944e-38, %v763
        %v765 = vsel %vm762, %v764, %v760
        %v766 = vmul.f32 1.0, %v765
        %v767 = vrcp.pop %v735
        %v768 = vmul.f32 %v735, %v767
        %v769 = vsub.f32 1.0, %v768
        %v770 = vmul.f32 %v767, %v769
        %v771 = vadd.f32 %v767, %v770
        %vm772 = vweird.f32 %v735
        %vm773 = vweird.f32 %v767
        %vm774 = vmor %vm772, %vm773
        %v775 = vsel %vm774, %v767, %v771
        %v776 = vand.u32 2147483647, %v735
        %vm777 = vcmp.eq.f32.partialorder %v776, 8.507059e+37
        %v778 = vand.u32 %v735, 2147483648
        %v779 = vor.u32 1.1754944e-38, %v778
        %v780 = vsel %vm777, %v779, %v775
        %v781 = vmul.f32 1.0, %v780
        %v782 = vrcp.pop %v736
        %v783 = vmul.f32 %v736, %v782
        %v784 = vsub.f32 1.0, %v783
        %v785 = vmul.f32 %v782, %v784
        %v786 = vadd.f32 %v782, %v785
        %vm787 = vweird.f32 %v736
        %vm788 = vweird.f32 %v782
        %vm789 = vmor %vm787, %vm788
        %v790 = vsel %vm789, %v782, %v786
        %v791 = vand.u32 2147483647, %v736
        %vm792 = vcmp.eq.f32.partialorder %v791, 8.507059e+37
        %v793 = vand.u32 %v736, 2147483648
        %v794 = vor.u32 1.1754944e-38, %v793
        %v795 = vsel %vm792, %v794, %v790
        %v796 = vmul.f32 1.0, %v795
        %vm797 = vcmask 130048
        %v799 = vsel %vm797, %v631, 0
        %v802 = vsel %vm797, %v646, 0
        %v805 = vsel %vm797, %v661, 0
        %v808 = vsel %vm797, %v676, 0
        %810 = vmatpush.msra.mxu0 0.0
        %811 = vmatpush.msra.mxu0 0.0
        %812 = vmatpush.msra.mxu0 0.0
        %813 = vmatpush.msra.mxu0 0.0
        %814 = vmatpush.msra.mxu0 0.0
        %815 = vmatpush.msra.mxu0 0.0
        %816 = vmatpush.msra.mxu0 0.0
        %817 = vmatpush.msra.mxu0 0.0
        %818 = vmatpush.msra.mxu0 0.0
        %819 = vmatpush.msra.mxu0 0.0
        %820 = vmatpush.msra.mxu0 0.0
        %821 = vmatpush.msra.mxu0 0.0
        %822 = vmatpush.msra.mxu0 0.0
        %823 = vmatpush.msra.mxu0 0.0
        %824 = vmatpush.msra.mxu0 %v379
        %825 = vmatpush.msra.mxu0 %v377
        %826 = vmatmul.f32.gmra.mxu0 %v799
        %v827 = vpop.f32.mrf.mxu0
        %v828 = vadd.f32 0.0, %v827
        %829 = vmatmul.f32.gmra.mxu0 %v802
        %v830 = vpop.f32.mrf.mxu0
        %v831 = vadd.f32 0.0, %v830
        %832 = vmatmul.f32.gmra.mxu0 %v805
        %v833 = vpop.f32.mrf.mxu0
        %v834 = vadd.f32 0.0, %v833
        %835 = vmatmul.f32.gmra.mxu0 %v808
        %v836 = vpop.f32.mrf.mxu0
        %v837 = vadd.f32 0.0, %v836
        %838 = vdwg.mxu0
        %839 = vmatpush.msra.mxu0 0.0
        %840 = vmatpush.msra.mxu0 0.0
        %841 = vmatpush.msra.mxu0 0.0
        %842 = vmatpush.msra.mxu0 0.0
        %843 = vmatpush.msra.mxu0 0.0
        %844 = vmatpush.msra.mxu0 0.0
        %845 = vmatpush.msra.mxu0 0.0
        %846 = vmatpush.msra.mxu0 0.0
        %847 = vmatpush.msra.mxu0 0.0
        %848 = vmatpush.msra.mxu0 0.0
        %849 = vmatpush.msra.mxu0 0.0
        %850 = vmatpush.msra.mxu0 0.0
        %851 = vmatpush.msra.mxu0 0.0
        %852 = vmatpush.msra.mxu0 0.0
        %853 = vmatpush.msra.mxu0 %v380
        %854 = vmatpush.msra.mxu0 %v378
        %855 = vmatmul.f32.gmra.mxu0 %v799
        %v856 = vpop.f32.mrf.mxu0
        %v857 = vadd.f32 0.0, %v856
        %858 = vmatmul.f32.gmra.mxu0 %v802
        %v859 = vpop.f32.mrf.mxu0
        %v860 = vadd.f32 0.0, %v859
        %861 = vmatmul.f32.gmra.mxu0 %v805
        %v862 = vpop.f32.mrf.mxu0
        %v863 = vadd.f32 0.0, %v862
        %864 = vmatmul.f32.gmra.mxu0 %v808
        %v865 = vpop.f32.mrf.mxu0
        %v866 = vadd.f32 0.0, %v865
        %867 = vdwg.mxu0
        %v869 = vsel %vm797, %v751, 0
        %v872 = vsel %vm797, %v766, 0
        %v875 = vsel %vm797, %v781, 0
        %v878 = vsel %vm797, %v796, 0
        %880 = vmatpush.msra.mxu0 0.0
        %881 = vmatpush.msra.mxu0 0.0
        %882 = vmatpush.msra.mxu0 0.0
        %883 = vmatpush.msra.mxu0 0.0
        %884 = vmatpush.msra.mxu0 0.0
        %885 = vmatpush.msra.mxu0 0.0
        %886 = vmatpush.msra.mxu0 0.0
        %887 = vmatpush.msra.mxu0 0.0
        %888 = vmatpush.msra.mxu0 0.0
        %889 = vmatpush.msra.mxu0 0.0
        %890 = vmatpush.msra.mxu0 0.0
        %891 = vmatpush.msra.mxu0 0.0
        %892 = vmatpush.msra.mxu0 0.0
        %893 = vmatpush.msra.mxu0 0.0
        %894 = vmatpush.msra.mxu0 %v383
        %895 = vmatpush.msra.mxu0 %v381
        %896 = vmatmul.f32.gmra.mxu0 %v869
        %v897 = vpop.f32.mrf.mxu0
        %v898 = vadd.f32 0.0, %v897
        %899 = vmatmul.f32.gmra.mxu0 %v872
        %v900 = vpop.f32.mrf.mxu0
        %v901 = vadd.f32 0.0, %v900
        %902 = vmatmul.f32.gmra.mxu0 %v875
        %v903 = vpop.f32.mrf.mxu0
        %v904 = vadd.f32 0.0, %v903
        %905 = vmatmul.f32.gmra.mxu0 %v878
        %v906 = vpop.f32.mrf.mxu0
        %v907 = vadd.f32 0.0, %v906
        %908 = vdwg.mxu0
        %909 = vmatpush.msra.mxu0 0.0
        %910 = vmatpush.msra.mxu0 0.0
        %911 = vmatpush.msra.mxu0 0.0
        %912 = vmatpush.msra.mxu0 0.0
        %913 = vmatpush.msra.mxu0 0.0
        %914 = vmatpush.msra.mxu0 0.0
        %915 = vmatpush.msra.mxu0 0.0
        %916 = vmatpush.msra.mxu0 0.0
        %917 = vmatpush.msra.mxu0 0.0
        %918 = vmatpush.msra.mxu0 0.0
        %919 = vmatpush.msra.mxu0 0.0
        %920 = vmatpush.msra.mxu0 0.0
        %921 = vmatpush.msra.mxu0 0.0
        %922 = vmatpush.msra.mxu0 0.0
        %923 = vmatpush.msra.mxu0 %v384
        %924 = vmatpush.msra.mxu0 %v382
        %925 = vmatmul.f32.gmra.mxu0 %v869
        %v926 = vpop.f32.mrf.mxu0
        %v927 = vadd.f32 0.0, %v926
        %928 = vmatmul.f32.gmra.mxu0 %v872
        %v929 = vpop.f32.mrf.mxu0
        %v930 = vadd.f32 0.0, %v929
        %931 = vmatmul.f32.gmra.mxu0 %v875
        %v932 = vpop.f32.mrf.mxu0
        %v933 = vadd.f32 0.0, %v932
        %934 = vmatmul.f32.gmra.mxu0 %v878
        %v935 = vpop.f32.mrf.mxu0
        %v936 = vadd.f32 0.0, %v935
        %937 = vdwg.mxu0
        %v938 = vmul.f32 %v828, %v898
        %v939 = vmul.f32 %v857, %v927
        %v940 = vmul.f32 %v831, %v901
        %v941 = vmul.f32 %v860, %v930
        %v942 = vmul.f32 %v834, %v904
        %v943 = vmul.f32 %v863, %v933
        %v944 = vmul.f32 %v837, %v907
        %v945 = vmul.f32 %v866, %v936
        %v946 = vadd.f32 %v938, 1.0
        %v947 = vadd.f32 %v939, 1.0
        %v948 = vadd.f32 %v940, 1.0
        %v949 = vadd.f32 %v941, 1.0
        %v950 = vadd.f32 %v942, 1.0
        %v951 = vadd.f32 %v943, 1.0
        %v952 = vadd.f32 %v944, 1.0
        %v953 = vadd.f32 %v945, 1.0
        %v954 = vmul.f32 %v385, %v946
        %v955 = vmul.f32 %v386, %v947
        %v956 = vmul.f32 %v387, %v948
        %v957 = vmul.f32 %v388, %v949
        %v958 = vmul.f32 %v389, %v950
        %v959 = vmul.f32 %v390, %v951
        %v960 = vmul.f32 %v391, %v952
        %v961 = vmul.f32 %v392, %v953
        %962 = vst [vmem:[%s298] sm:$0xff] %v954
        %963 = vst [vmem:[%s298 + $0x8] sm:$0xff] %v955
        %964 = vst [vmem:[%s298 + $0x10] sm:$0xff] %v956
        %965 = vst [vmem:[%s298 + $0x18] sm:$0xff] %v957
        %966 = vst [vmem:[%s298 + $0x20] sm:$0xff] %v958
        %967 = vst [vmem:[%s298 + $0x28] sm:$0xff] %v959
        %968 = vst [vmem:[%s298 + $0x30] sm:$0xff] %v960
        %969 = vst [vmem:[%s298 + $0x38] sm:$0xff] %v961
        %s970 = sand.u32 %s203, 1
        %s971 = scalar_lea.sflag [#allocation3], %s970
        %s972 = sand.u32 %s203, 1
        %s973 = smul.addr %s972, 64
        %s974 = scalar_lea.vmem [#allocation2], %s973
        // Predicated region
        $region53: #{tpu_custom_call.1} parent=51 // pred_check
          %p975 = pneg %p213
        $region54: #{tpu_custom_call.1} parent=51 // pred_check_branch
          %977 = sbr.rel (%p975) target = $region56
        $region55: #{tpu_custom_call.1} parent=51 // pred_region
          %979 = vsyncadd %s971, 0
          %s980 = smul.addr %s22, 8
          %s981 = smul.addr %s980, 8
          %s982 = scalar_lea.hbm %s8, %s981
          %s983 = sshll.u32 %s974, 4
          %s984 = int_to_ptr.vmem [resolvable:$true] %s983
          %s985 = sshll.u32 %s982, 4
          %s986 = int_to_ptr.hbm [resolvable:$true] %s985
          %991 = dma.vmem_to_hbm [thread:$0]  %s984, 1024, %s986, %s971, 256, 256, 16
        $region56: #{tpu_custom_call.1} parent=51 // pred_fallthru
          _
      $region52: #{tpu_custom_call.1} parent=5 // pred_fallthru
        _
      %p992 = scmp.le.s32.totalorder 2, %s17
      // Predicated region
      $region57: #{tpu_custom_call.1} parent=5 // pred_check
        %p993 = pneg %p992
      $region58: #{tpu_custom_call.1} parent=5 // pred_check_branch
        %995 = sbr.rel (%p993) target = $region60
      $region59: #{tpu_custom_call.1} parent=5 // pred_region
        %s996 = ssub.s32 %s17, 2
        // Predicated region
        $region61: #{tpu_custom_call.1} parent=59 // pred_check
          %p997 = pneg %p219
        $region62: #{tpu_custom_call.1} parent=59 // pred_check_branch
          %999 = sbr.rel (%p997) target = $region64
        $region63: #{tpu_custom_call.1} parent=59 // pred_region
          %s1000 = sand.u32 %s204, 1
          %s1001 = scalar_lea.sflag [#allocation3], %s1000
          %s1002 = sand.u32 %s204, 1
          %s1003 = smul.addr %s1002, 64
          %s1004 = scalar_lea.vmem [#allocation2], %s1003
          %1006 = dma.done %s1001, 1024
        $region64: #{tpu_custom_call.1} parent=59 // pred_fallthru
          _
      $region60: #{tpu_custom_call.1} parent=5 // pred_fallthru
        _
    $region6: #{tpu_custom_call.1} parent=1 // loop_footer
      %s21 = sadd.s32 1, %s17
    $region7: #{tpu_custom_call.1} parent=1 // loop_footer_branch
      %16 = sbr.rel target = $region3
    $region8: #{tpu_custom_call.1} parent=1 // loop_exit
      _
    %1007 = vsyncpa [#allocation3], 1
    %s1008 = scalar_lea.sflag [#allocation3], 1
    %1009 = vsyncpa %s1008, 1

</llo_original>
